<compile_context>
chip_gen: v7x
topology: tpu7x:2x2x1
jax: 0.10.0
libtpu: 0.0.40
codegen_flags: <defaults>
</compile_context>

<pallas_src>
from functools import partial

import numpy as np
import jax
import jax.numpy as jnp
from jax.experimental import pallas as pl
from jax.experimental.pallas import tpu as pltpu

_TL_CAP = 65536   # max pairs per grid step along the lane axis (multiple of 128)
_MIN_PAD = 128    # minimum padded pair count (lane tile granularity)


def _bucket(nnz):
    """Pad nnz up to a power-of-two bucket (>= _MIN_PAD) to bound recompiles."""
    return max(_MIN_PAD, 1 << (max(int(nnz), 1) - 1).bit_length())


def _pair_kernel(d_ref, off_ref, pc_ref, dist_ref):
    # d_ref, off_ref: [3, TL] f32 (lane-major: pair axis is the lane axis)
    # pc_ref:         [3, TL] f32   paircoord
    # dist_ref:       [1, TL] f32   Euclidean norm
    pc = d_ref[...] + off_ref[...]
    pc_ref[...] = pc
    # 3-sublane reduce -> XLU slot (otherwise idle); stays lane-dense.
    dist_ref[...] = jnp.sqrt(jnp.sum(pc * pc, axis=0, keepdims=True))


def _pair_geometry(d, off):
    """d, off: [3, P] f32 lane-major; P is a power-of-two multiple of 128."""
    p = d.shape[1]
    tl = min(_TL_CAP, p)          # p is a power of two >= 128, so tl divides p
    return pl.pallas_call(
        _pair_kernel,
        out_shape=(jax.ShapeDtypeStruct((3, p), jnp.float32),
                   jax.ShapeDtypeStruct((1, p), jnp.float32)),
        grid=(p // tl,),
        in_specs=[pl.BlockSpec((3, tl), lambda i: (0, i)),
                  pl.BlockSpec((3, tl), lambda i: (0, i))],
        out_specs=[pl.BlockSpec((3, tl), lambda i: (0, i)),
                   pl.BlockSpec((1, tl), lambda i: (0, i))],
        compiler_params=pltpu.CompilerParams(
            dimension_semantics=("parallel",)),
    )(d, off)


@partial(jax.jit, static_argnames=("n_atoms_max", "n_molecules"))
def _uncache_padded(sparse_dense, coordinates, cell, real_atoms, inv_real_atoms,
                    mol, pfabs, psabs, offset_index, n_atoms_max, n_molecules):
    """Fixed-size (padded) pair list -> pair geometry.  Runs fully on device."""
    cell_offsets = sparse_dense[mol, pfabs, psabs, offset_index]          # [P, 3]
    pfb = pfabs + mol * n_atoms_max
    psb = psabs + mol * n_atoms_max
    pair_first = inv_real_atoms[pfb]
    pair_second = inv_real_atoms[psb]
    atom_coordinates = coordinates.reshape(n_molecules * n_atoms_max, 3)[real_atoms]

    dt = jnp.result_type(coordinates.dtype, cell.dtype)

    # Build kernel inputs lane-major directly (no [P,k] -> [k,P] transpose pass).
    ac_t = atom_coordinates.astype(jnp.float32).T                         # [3, n_real]
    d = ac_t[:, pair_first] - ac_t[:, pair_second]                        # [3, P]
    # off[j, p] = sum_i cell_offsets[p, i] * cell[mol[p], i, j]; fuses with the
    # cell[mol] gather, so the 3x3 cell is never replicated per pair in HBM.
    off = jnp.einsum('pi,pij->jp', cell_offsets.astype(jnp.float32),
                     cell[mol].astype(jnp.float32))                       # [3, P]

    pc_t, dist_row = _pair_geometry(d, off)                               # [3,P],[1,P]
    paircoord = pc_t.T.astype(dt)                                         # [P, 3]
    distflat = dist_row[0].astype(dt)                                     # [P]
    return distflat, pair_first, pair_second, paircoord, cell_offsets


def pair_uncacher_forward(sparse_dense, coordinates, cell, real_atoms,
                          inv_real_atoms, n_atoms_max, n_molecules):
    """Equivalent of PairUncacher.forward (dense 'cached' pair tensor input).

    sparse_dense: dense [n_molecules, n_atoms_max, n_atoms_max, n_images, 3]
    Returns (distflat, pair_first, pair_second, paircoord, cell_offsets,
             offset_index).
    """
    sparse_dense = jnp.asarray(sparse_dense)
    # TODO(synk): torch's .to_sparse/.coalesce is dynamic-shape; we use a bounded
    # on-device nonzero (pairs whose stored offset is exactly [0,0,0] are
    # dropped — identical to .to_sparse on a dense tensor), padded to a
    # power-of-two bucket.  The single scalar D->H sync for nnz is required
    # because the result length is dynamic; it could be removed with a static
    # max-pairs bound if the caller can provide one.
    mask = jnp.any(sparse_dense != 0, axis=-1)           # [M, A, A, I]
    nnz = int(jnp.count_nonzero(mask))                   # one scalar D->H sync
    p_pad = _bucket(nnz)
    mol, pfabs, psabs, offset_index = jnp.nonzero(mask, size=p_pad, fill_value=0)
    mol = mol.astype(jnp.int32)
    pfabs = pfabs.astype(jnp.int32)
    psabs = psabs.astype(jnp.int32)
    offset_index = offset_index.astype(jnp.int32)

    distflat, pair_first, pair_second, paircoord, cell_offsets = _uncache_padded(
        sparse_dense, coordinates, cell, real_atoms, inv_real_atoms,
        mol, pfabs, psabs, offset_index, n_atoms_max, n_molecules)

    # Padding rows (fill_value=0) give pc=0, dist=0 in the forward pass and are
    # sliced off here; mask them before any future backward use (sqrt at 0).
    return (distflat[:nnz], pair_first[:nnz], pair_second[:nnz],
            paircoord[:nnz], cell_offsets[:nnz], offset_index[:nnz])


if __name__ == "__main__":
    n_molecules, n_atoms_max, n_images = 2, 4, 3

    key = jax.random.PRNGKey(0)
    kc, kcell = jax.random.split(key)
    coordinates = jax.random.normal(kc, (n_molecules, n_atoms_max, 3),
                                    dtype=jnp.float32) * 2.0
    cell = (5.0 * jnp.eye(3, dtype=jnp.float32)[None]
            + 0.1 * jax.random.normal(kcell, (n_molecules, 3, 3),
                                      dtype=jnp.float32))

    # real atoms: mol 0 has atoms {0,1,2} real (atom 3 is padding), mol 1 all real
    real_atoms = jnp.asarray([0, 1, 2, 4, 5, 6, 7], jnp.int32)
    inv_real_atoms = jnp.asarray([0, 1, 2, 0, 3, 4, 5, 6], jnp.int32)

    # dense "cached" pair tensor [mol, i, j, image, 3] with integer cell offsets
    sparse_dense = np.zeros((n_molecules, n_atoms_max, n_atoms_max, n_images, 3),
                            np.float32)
    sparse_dense[0, 0, 1, 1] = [1, 0, 0]
    sparse_dense[0, 1, 0, 1] = [-1, 0, 0]
    sparse_dense[0, 0, 2, 0] = [0, 1, 0]
    sparse_dense[0, 2, 0, 0] = [0, -1, 0]
    sparse_dense[0, 1, 2, 2] = [0, 0, 1]
    sparse_dense[1, 0, 3, 0] = [1, 1, 0]
    sparse_dense[1, 3, 0, 0] = [-1, -1, 0]
    sparse_dense[1, 1, 2, 1] = [0, 0, -1]
    sparse_dense[1, 2, 1, 1] = [0, 0, 1]

    out = pair_uncacher_forward(sparse_dense, coordinates, cell, real_atoms,
                                inv_real_atoms, n_atoms_max, n_molecules)
    out = jax.block_until_ready(out)
    distflat, pair_first, pair_second, paircoord, cell_offsets, offset_index = out

    # pure-numpy reference check
    sp = np.asarray(sparse_dense)
    mask_r = np.any(sp != 0, axis=-1)
    mol_r, pf_r, ps_r, oi_r = np.nonzero(mask_r)
    co_r = sp[mol_r, pf_r, ps_r, oi_r].astype(np.float32)
    inv_r = np.asarray(inv_real_atoms)
    real_r = np.asarray(real_atoms)
    ac_r = np.asarray(coordinates).reshape(-1, 3)[real_r]
    p1 = inv_r[pf_r + mol_r * n_atoms_max]
    p2 = inv_r[ps_r + mol_r * n_atoms_max]
    off_r = np.einsum('pi,pij->pj', co_r, np.asarray(cell)[mol_r])
    pc_r = ac_r[p1] - ac_r[p2] + off_r
    d_r = np.linalg.norm(pc_r, axis=1)

    assert np.allclose(np.asarray(paircoord), pc_r, atol=1e-5)
    assert np.allclose(np.asarray(distflat), d_r, atol=1e-5)
    assert np.array_equal(np.asarray(pair_first), p1)
    assert np.array_equal(np.asarray(pair_second), p2)
    assert np.allclose(np.asarray(cell_offsets), co_r)
    assert np.array_equal(np.asarray(offset_index), oi_r)

    print("KERNEL_OK")
</pallas_src>

<mosaic_0001>
module attributes {stable_mosaic.version = 11 : i64} {
  func.func @_pair_kernel(%arg0: i32, %arg1: memref<3x128xf32, #tpu.memory_space<vmem>>, %arg2: memref<3x128xf32, #tpu.memory_space<vmem>>, %arg3: memref<3x128xf32, #tpu.memory_space<vmem>>, %arg4: memref<1x128xf32, #tpu.memory_space<vmem>>) attributes {dimension_semantics = [#tpu.dimension_semantics<parallel>], iteration_bounds = array<i64: 1>, scalar_prefetch = 0 : i64, scratch_operands = 0 : i64, tpu.core_type = #tpu.core_type<tc>, window_params = [{transform_indices = @transform_0, window_bounds = array<i64: 3, 128>}, {transform_indices = @transform_1, window_bounds = array<i64: 3, 128>}, {transform_indices = @transform_2, window_bounds = array<i64: 3, 128>}, {transform_indices = @transform_3, window_bounds = array<i64: 1, 128>}]} {
    %c0 = arith.constant 0 : index
    %c0_0 = arith.constant 0 : index
    %0 = vector.load %arg1[%c0, %c0_0] : memref<3x128xf32, #tpu.memory_space<vmem>>, vector<3x128xf32>
    %c0_1 = arith.constant 0 : index
    %c0_2 = arith.constant 0 : index
    %1 = vector.load %arg2[%c0_1, %c0_2] : memref<3x128xf32, #tpu.memory_space<vmem>>, vector<3x128xf32>
    %2 = arith.addf %0, %1 : vector<3x128xf32>
    %c0_3 = arith.constant 0 : index
    %c0_4 = arith.constant 0 : index
    %3 = vector.load %arg3[%c0_3, %c0_4] : memref<3x128xf32, #tpu.memory_space<vmem>>, vector<3x128xf32>
    tpu.vector_store %arg3[%c0_3, %c0_4], %2 {strides = array<i32>} : memref<3x128xf32, #tpu.memory_space<vmem>>, vector<3x128xf32>,
    %4 = arith.mulf %2, %2 : vector<3x128xf32>
    %cst = arith.constant dense<0.000000e+00> : vector<128xf32>
    %5 = vector.multi_reduction <add>, %4, %cst [0] : vector<3x128xf32> to vector<128xf32>
    %6 = vector.shape_cast %5 : vector<128xf32> to vector<1x128xf32>
    %7 = math.sqrt %6 : vector<1x128xf32>
    %c0_5 = arith.constant 0 : index
    %c0_6 = arith.constant 0 : index
    %8 = vector.load %arg4[%c0_5, %c0_6] : memref<1x128xf32, #tpu.memory_space<vmem>>, vector<1x128xf32>
    tpu.vector_store %arg4[%c0_5, %c0_6], %7 {strides = array<i32>} : memref<1x128xf32, #tpu.memory_space<vmem>>, vector<1x128xf32>,
    return
  }
  func.func @transform_0(%arg0: i32) -> (i32, i32) {
    %c0_i32 = arith.constant 0 : i32
    %c0_i32_0 = arith.constant 0 : i32
    return %c0_i32, %arg0 : i32, i32
  }
  func.func @transform_1(%arg0: i32) -> (i32, i32) {
    %c0_i32 = arith.constant 0 : i32
    %c0_i32_0 = arith.constant 0 : i32
    return %c0_i32, %arg0 : i32, i32
  }
  func.func @transform_2(%arg0: i32) -> (i32, i32) {
    %c0_i32 = arith.constant 0 : i32
    %c0_i32_0 = arith.constant 0 : i32
    return %c0_i32, %arg0 : i32, i32
  }
  func.func @transform_3(%arg0: i32) -> (i32, i32) {
    %c0_i32 = arith.constant 0 : i32
    %c0_i32_0 = arith.constant 0 : i32
    return %c0_i32, %arg0 : i32, i32
  }
}

</mosaic_0001>

<llo_original>
// kernel: _uncache_padded.1
$region0: #{_uncache_padded.1}
  #allocation0 [shape = 'u32[]', space=smem, size = 0x4, offset = 0x4, fixed_abs, tag = 'smem constant byte address 0x4 - core index']
  #allocation1 [shape = 'u32[144,128]{1,0:T(1,128)}', space=vmem, size = 0x12000, scoped, tag = 'internal scratch']
  %s0 = inlined_call_operand.vmem [shape: f32[3,128], index: 0, kind: input, shape index: {}]
  %s1 = inlined_call_operand.vmem [shape: f32[3,128], index: 1, kind: input, shape index: {}]
  %s2 = inlined_call_operand.hbm [shape: f32[3,128], index: 2, kind: output, shape index: {0}]
  %s3 = inlined_call_operand.hbm [shape: f32[1,128], index: 3, kind: output, shape index: {1}]
  %4 = xla_tuple %s2, %s3
  %s5 = sld [smem:[#allocation0]]
  $region26: #{_uncache_padded.1} parent=0
    _
  %s7 = ssub.s32 1, %s5
  %s8 = scalar_select 0, %s7, %s5
  $region1: #{_uncache_padded.1} parent=0
    #allocation2 [shape = 'u8[2048]{0}', space=vmem, size = 0x800, scoped, tag = 'output window, operand 0, single buffered']
    #allocation3 [shape = 's32[1]{0}', space=sflag, size = 0x4, scoped, tag = 'scoped memory for _uncache_padded.1']
    #allocation4 [shape = 'u8[512]{0}', space=vmem, size = 0x400, scoped, tag = 'output window, operand 1, single buffered']
    #allocation5 [shape = 's32[1]{0}', space=sflag, size = 0x4, scoped, tag = 'scoped memory for _uncache_padded.1']
    %9 = vsyncpa [#allocation3], 0
    %10 = vsyncpa [#allocation5], 0
    // Predicated region
    $region2: #{_uncache_padded.1} parent=1 // pred_check
      _
    $region3: #{_uncache_padded.1} parent=1 // pred_check_branch
      %12 = sbr.rel (0) target = $region5
    $region4: #{_uncache_padded.1} parent=1 // pred_region
      _
    $region5: #{_uncache_padded.1} parent=1 // pred_fallthru
      _
    // Predicated region
    $region6: #{_uncache_padded.1} parent=1 // pred_check
      _
    $region7: #{_uncache_padded.1} parent=1 // pred_check_branch
      %14 = sbr.rel (0) target = $region9
    $region8: #{_uncache_padded.1} parent=1 // pred_region
      _
    $region9: #{_uncache_padded.1} parent=1 // pred_fallthru
      _
    %v15 = vld [vmem:[%s0] sm:$0x7]
    %v16 = vld [vmem:[%s1] sm:$0x7]
    %v17 = vadd.f32 %v15, %v16
    %18 = vst [vmem:[#allocation2] sm:$0x7] %v17
    %v19 = vmul.f32 %v17, %v17
    %vm20 = vcmask 1042432
    %v21 = vsel %vm20, %v19, 0.0
    %v22 = vrot.slane %v21, 4
    %v23 = vadd.f32 %v21, %v22
    %v24 = vrot.slane %v23, 2
    %v25 = vadd.f32 %v23, %v24
    %v26 = vrot.slane %v25, 1
    %v27 = vadd.f32 %v25, %v26
    %v28 = vrsqrt.pop %v27
    %v29 = vmul.f32 %v27, %v28
    %vm30 = vcmp.eq.f32.partialorder %v27, inf
    %v31 = vsel %vm30, %v27, %v29
    %vm32 = vcmp.eq.f32.partialorder %v27, 0.0
    %v33 = vand.u32 %v27, 2147483648
    %v34 = vsel %vm32, %v33, %v31
    %35 = vst [vmem:[#allocation4] sm:$0x1] %v34
    // Predicated region
    $region10: #{_uncache_padded.1} parent=1 // pred_check
      _
    $region11: #{_uncache_padded.1} parent=1 // pred_check_branch
      %37 = sbr.rel (0) target = $region13
    $region12: #{_uncache_padded.1} parent=1 // pred_region
      %s39 = ssub.s32 64, 64
      %40 = vsyncadd [#allocation3], %s39
      %s42 = sshll.u32 [#allocation2], 4
      %s43 = int_to_ptr.vmem [resolvable:$true] %s42
      %45 = dma.vmem_to_hbm [thread:$0]  %s43, 64, %s2, [#allocation3]
    $region13: #{_uncache_padded.1} parent=1 // pred_fallthru
      _
    // Predicated region
    $region14: #{_uncache_padded.1} parent=1 // pred_check
      _
    $region15: #{_uncache_padded.1} parent=1 // pred_check_branch
      %47 = sbr.rel (0) target = $region17
    $region16: #{_uncache_padded.1} parent=1 // pred_region
      %s49 = ssub.s32 16, 16
      %50 = vsyncadd [#allocation5], %s49
      %s52 = sshll.u32 [#allocation4], 4
      %s53 = int_to_ptr.vmem [resolvable:$true] %s52
      %55 = dma.vmem_to_hbm [thread:$0]  %s53, 16, %s3, [#allocation5]
    $region17: #{_uncache_padded.1} parent=1 // pred_fallthru
      _
    // Predicated region
    $region18: #{_uncache_padded.1} parent=1 // pred_check
      _
    $region19: #{_uncache_padded.1} parent=1 // pred_check_branch
      %57 = sbr.rel (0) target = $region21
    $region20: #{_uncache_padded.1} parent=1 // pred_region
      %58 = dma.done [#allocation3], 64
    $region21: #{_uncache_padded.1} parent=1 // pred_fallthru
      _
    // Predicated region
    $region22: #{_uncache_padded.1} parent=1 // pred_check
      _
    $region23: #{_uncache_padded.1} parent=1 // pred_check_branch
      %60 = sbr.rel (0) target = $region25
    $region24: #{_uncache_padded.1} parent=1 // pred_region
      %61 = dma.done [#allocation5], 16
    $region25: #{_uncache_padded.1} parent=1 // pred_fallthru
      _
    %62 = vsyncpa [#allocation3], 1
    %63 = vsyncpa [#allocation5], 1

</llo_original>
